<compile_context>
chip_gen: v5e
topology: v5e:2x2
jax: 0.10.0
libtpu: 0.0.40
codegen_flags: <defaults>
</compile_context>

<pallas_src>
import functools

import jax
import jax.numpy as jnp
from jax.experimental import pallas as pl
from jax.experimental.pallas import tpu as pltpu


def _loss_kernel(pred_ref, targ_ref, w_ref, conf_ref, loss_ref,
                 num_ref, den_ref, *, n_valid):
    i = pl.program_id(0)

    preds = pred_ref[...].astype(jnp.float32)   # (C, T) logits
    targs = targ_ref[...].astype(jnp.float32)   # (C, T) soft / one-hot targets
    w = w_ref[...]                               # (C, 1) class weights (f32)

    c, t = preds.shape

    # ---- softmax statistics along the class (sublane) axis -----------------
    col_max = jnp.max(preds, axis=0, keepdims=True)        # (1, T)
    exps = jnp.exp(preds - col_max)                         # (C, T)
    denom = jnp.sum(exps, axis=0, keepdims=True)            # (1, T)

    # max(softmax(x)) == 1 / sum(exp(x - max(x))): no probs materialization.
    conf_ref[...] = pl.reciprocal(denom, approx=False)      # (1, T) lane-dense

    # ---- argmax(targets) over classes (first-occurrence tie-break) ---------
    cls = jax.lax.broadcasted_iota(jnp.int32, (c, t), 0)     # (C, T)
    t_max = jnp.max(targs, axis=0, keepdims=True)            # (1, T)
    idx = jnp.min(jnp.where(targs == t_max, cls, c), axis=0, keepdims=True)
    sel = cls == idx                                          # (C, T) one-hot mask

    # ---- weighted cross-entropy per sample ----------------------------------
    lse = col_max + jnp.log(denom)                                     # (1, T)
    sel_logit = jnp.sum(jnp.where(sel, preds, 0.0), axis=0, keepdims=True)
    ce = lse - sel_logit                                               # (1, T)
    w_col = jnp.sum(jnp.where(sel, w, 0.0), axis=0, keepdims=True)     # (1, T)

    # Mask out padded samples (columns beyond the real batch size).
    lane = jax.lax.broadcasted_iota(jnp.int32, (1, t), 1)
    w_col = jnp.where(i * t + lane < n_valid, w_col, 0.0)

    # ---- running weighted-CE sum / weight sum across tiles ------------------
    @pl.when(i == 0)
    def _init():
        num_ref[...] = jnp.zeros_like(num_ref)
        den_ref[...] = jnp.zeros_like(den_ref)

    num_ref[...] += jnp.sum(w_col * ce, axis=1, keepdims=True)
    den_ref[...] += jnp.sum(w_col, axis=1, keepdims=True)

    @pl.when(i == pl.num_programs(0) - 1)
    def _finalize():
        loss_ref[...] = num_ref[...] / den_ref[...]


def custom_loss_with_confidence(predictions, targets, class_weights, *,
                                tile_rows=None):
    """predictions, targets: (N, C); class_weights: (C,). Returns (loss, conf)."""
    n, c = predictions.shape

    # Transposed (C, N) layout: batch on lanes, classes on sublanes.
    pred_t = jnp.transpose(predictions)
    targ_t = jnp.transpose(targets)
    w2d = class_weights.reshape(c, 1).astype(jnp.float32)

    # Row-tile: lane multiple of 128, sized so double-buffered input blocks
    # stay well below the scoped-VMEM limit on every TPU generation (v7x incl.)
    if tile_rows is None:
        block_budget_bytes = 512 * 1024
        max_tile = max(128, (block_budget_bytes // (c * 4)) // 128 * 128)
    else:
        max_tile = tile_rows            # must be a multiple of 128 if n > tile

    if n <= max_tile:
        tile = n                        # single full-extent block, no padding
        n_pad = n
    else:
        tile = max_tile
        n_pad = pl.cdiv(n, tile) * tile
        pred_t = jnp.pad(pred_t, ((0, 0), (0, n_pad - n)))
        targ_t = jnp.pad(targ_t, ((0, 0), (0, n_pad - n)))

    grid = (n_pad // tile,)

    itemsize = jnp.dtype(predictions.dtype).itemsize
    cost = pl.CostEstimate(
        flops=10 * n * c,
        transcendentals=n * c + n,
        bytes_accessed=2 * n * c * itemsize + n * 4 + c * 4 + 4,
    )

    kernel = functools.partial(_loss_kernel, n_valid=n)

    conf2d, loss = pl.pallas_call(
        kernel,
        out_shape=(
            jax.ShapeDtypeStruct((1, n_pad), jnp.float32),   # confidences
            jax.ShapeDtypeStruct((1, 1), jnp.float32),       # scalar loss
        ),
        grid_spec=pltpu.PrefetchScalarGridSpec(
            num_scalar_prefetch=0,
            grid=grid,
            in_specs=[
                pl.BlockSpec((c, tile), lambda i: (0, i)),   # predictions^T
                pl.BlockSpec((c, tile), lambda i: (0, i)),   # targets^T
                pl.BlockSpec((c, 1), lambda i: (0, 0)),      # class weights
            ],
            out_specs=(
                pl.BlockSpec((1, tile), lambda i: (0, i)),   # conf (lane-dense)
                pl.BlockSpec((1, 1), lambda i: (0, 0)),      # loss (resident)
            ),
            scratch_shapes=[
                pltpu.VMEM((1, 1), jnp.float32),   # weighted-CE numerator
                pltpu.VMEM((1, 1), jnp.float32),   # weight-sum denominator
            ],
        ),
        compiler_params=pltpu.CompilerParams(
            dimension_semantics=("arbitrary",),    # loss reduction carried
            vmem_limit_bytes=32 * 1024 * 1024,
        ),
        cost_estimate=cost,
    )(pred_t, targ_t, w2d)

    # TODO(synk): on v7x the row axis could additionally be sharded across the
    # two TensorCores with per-core (num, den) partials combined in the wrapper.
    return loss[0, 0], conf2d[0, :n]


def _reference(predictions, targets, class_weights):
    """Plain-JAX reference mirroring the PyTorch module."""
    probs = jax.nn.softmax(predictions, axis=1)
    conf = jnp.max(probs, axis=1)
    correct = jnp.argmax(targets, axis=1)
    logp = jax.nn.log_softmax(predictions, axis=1)
    ce_i = -jnp.take_along_axis(logp, correct[:, None], axis=1)[:, 0]
    w_i = class_weights[correct]
    loss = jnp.sum(w_i * ce_i) / jnp.sum(w_i)
    return loss, conf


if __name__ == "__main__":
    key = jax.random.PRNGKey(0)

    # --- case 1: tiny, single-tile path (matches the module's usage) --------
    N, C = 8, 4
    k1, k2, key = jax.random.split(key, 3)
    predictions = jax.random.normal(k1, (N, C), dtype=jnp.float32)
    labels = jax.random.randint(k2, (N,), 0, C)
    targets = jax.nn.one_hot(labels, C, dtype=jnp.float32)
    class_weights = jnp.arange(1, C + 1, dtype=jnp.float32)
    class_weights = class_weights / class_weights.sum()

    loss, conf = custom_loss_with_confidence(predictions, targets, class_weights)
    jax.block_until_ready((loss, conf))
    ref_loss, ref_conf = _reference(predictions, targets, class_weights)
    assert jnp.allclose(loss, ref_loss, atol=1e-5, rtol=1e-5), (loss, ref_loss)
    assert jnp.allclose(conf, ref_conf, atol=1e-5, rtol=1e-5)

    # --- case 2: multi-tile path with padding + masking ----------------------
    N2, C2 = 300, 5
    k3, k4, key = jax.random.split(key, 3)
    preds2 = jax.random.normal(k3, (N2, C2), dtype=jnp.float32)
    labels2 = jax.random.randint(k4, (N2,), 0, C2)
    targets2 = jax.nn.one_hot(labels2, C2, dtype=jnp.float32)
    w2 = jnp.arange(1, C2 + 1, dtype=jnp.float32)
    w2 = w2 / w2.sum()

    loss2, conf2 = custom_loss_with_confidence(
        preds2, targets2, w2, tile_rows=128)  # grid of 3 tiles, 84 padded rows
    jax.block_until_ready((loss2, conf2))
    ref_loss2, ref_conf2 = _reference(preds2, targets2, w2)
    assert jnp.allclose(loss2, ref_loss2, atol=1e-5, rtol=1e-5), (loss2, ref_loss2)
    assert jnp.allclose(conf2, ref_conf2, atol=1e-5, rtol=1e-5)

    print("KERNEL_OK")
</pallas_src>

<mosaic_0001>
module attributes {stable_mosaic.version = 11 : i64} {
  func.func @_loss_kernel(%arg0: i32, %arg1: memref<4x8xf32, #tpu.memory_space<vmem>>, %arg2: memref<4x8xf32, #tpu.memory_space<vmem>>, %arg3: memref<4x1xf32, #tpu.memory_space<vmem>>, %arg4: memref<1x8xf32, #tpu.memory_space<vmem>>, %arg5: memref<1x1xf32, #tpu.memory_space<vmem>>, %arg6: memref<1x1xf32, #tpu.memory_space<vmem>>, %arg7: memref<1x1xf32, #tpu.memory_space<vmem>>) attributes {dimension_semantics = [#tpu.dimension_semantics<arbitrary>], iteration_bounds = array<i64: 1>, scalar_prefetch = 0 : i64, scratch_operands = 2 : i64, tpu.core_type = #tpu.core_type<tc>, window_params = [{transform_indices = @transform_0, window_bounds = array<i64: 4, 8>}, {transform_indices = @transform_1, window_bounds = array<i64: 4, 8>}, {pipeline_mode = #tpu.pipeline_mode<synchronous>, transform_indices = @transform_2, window_bounds = array<i64: 4, 1>}, {transform_indices = @transform_3, window_bounds = array<i64: 1, 8>}, {pipeline_mode = #tpu.pipeline_mode<synchronous>, transform_indices = @transform_4, window_bounds = array<i64: 1, 1>}]} {
    %c0 = arith.constant 0 : index
    %c0_0 = arith.constant 0 : index
    %0 = vector.load %arg1[%c0, %c0_0] : memref<4x8xf32, #tpu.memory_space<vmem>>, vector<4x8xf32>
    %c0_1 = arith.constant 0 : index
    %c0_2 = arith.constant 0 : index
    %1 = vector.load %arg2[%c0_1, %c0_2] : memref<4x8xf32, #tpu.memory_space<vmem>>, vector<4x8xf32>
    %c0_3 = arith.constant 0 : index
    %c0_4 = arith.constant 0 : index
    %2 = vector.load %arg3[%c0_3, %c0_4] : memref<4x1xf32, #tpu.memory_space<vmem>>, vector<4x1xf32>
    %cst = arith.constant dense<0xFF800000> : vector<8xf32>
    %3 = vector.multi_reduction <maximumf>, %0, %cst [0] : vector<4x8xf32> to vector<8xf32>
    %4 = vector.shape_cast %3 : vector<8xf32> to vector<1x8xf32>
    %5 = vector.broadcast %4 : vector<1x8xf32> to vector<4x8xf32>
    %6 = arith.subf %0, %5 : vector<4x8xf32>
    %7 = math.exp %6 : vector<4x8xf32>
    %cst_5 = arith.constant dense<0.000000e+00> : vector<8xf32>
    %8 = vector.multi_reduction <add>, %7, %cst_5 [0] : vector<4x8xf32> to vector<8xf32>
    %9 = vector.shape_cast %8 : vector<8xf32> to vector<1x8xf32>
    %10 = tpu.reciprocal %9 : vector<1x8xf32> -> vector<1x8xf32>
    %c0_6 = arith.constant 0 : index
    %c0_7 = arith.constant 0 : index
    %11 = vector.load %arg4[%c0_6, %c0_7] : memref<1x8xf32, #tpu.memory_space<vmem>>, vector<1x8xf32>
    tpu.vector_store %arg4[%c0_6, %c0_7], %10 {strides = array<i32>} : memref<1x8xf32, #tpu.memory_space<vmem>>, vector<1x8xf32>,
    %12 = tpu.iota {dimensions = array<i32: 0>} : vector<4x8xi32>
    %cst_8 = arith.constant dense<0xFF800000> : vector<8xf32>
    %13 = vector.multi_reduction <maximumf>, %1, %cst_8 [0] : vector<4x8xf32> to vector<8xf32>
    %14 = vector.shape_cast %13 : vector<8xf32> to vector<1x8xf32>
    %15 = vector.broadcast %14 : vector<1x8xf32> to vector<4x8xf32>
    %16 = arith.cmpf oeq, %1, %15 : vector<4x8xf32>
    %c4_i32 = arith.constant 4 : i32
    %17 = vector.broadcast %c4_i32 : i32 to vector<4x8xi32>
    %18 = arith.select %16, %12, %17 : vector<4x8xi1>, vector<4x8xi32>
    %cst_9 = arith.constant dense<2147483647> : vector<8xi32>
    %19 = vector.multi_reduction <minsi>, %18, %cst_9 [0] : vector<4x8xi32> to vector<8xi32>
    %20 = vector.shape_cast %19 : vector<8xi32> to vector<1x8xi32>
    %21 = vector.broadcast %20 : vector<1x8xi32> to vector<4x8xi32>
    %22 = arith.cmpi eq, %12, %21 : vector<4x8xi32>
    %23 = math.log %9 : vector<1x8xf32>
    %24 = arith.addf %4, %23 : vector<1x8xf32>
    %cst_10 = arith.constant 0.000000e+00 : f32
    %25 = vector.broadcast %cst_10 : f32 to vector<4x8xf32>
    %26 = arith.select %22, %0, %25 : vector<4x8xi1>, vector<4x8xf32>
    %cst_11 = arith.constant dense<0.000000e+00> : vector<8xf32>
    %27 = vector.multi_reduction <add>, %26, %cst_11 [0] : vector<4x8xf32> to vector<8xf32>
    %28 = vector.shape_cast %27 : vector<8xf32> to vector<1x8xf32>
    %29 = arith.subf %24, %28 : vector<1x8xf32>
    %cst_12 = arith.constant 0.000000e+00 : f32
    %30 = vector.shape_cast %2 : vector<4x1xf32> to vector<4x1xf32>
    %31 = vector.broadcast %30 : vector<4x1xf32> to vector<4x8xf32>
    %32 = vector.broadcast %cst_12 : f32 to vector<4x8xf32>
    %33 = arith.select %22, %31, %32 : vector<4x8xi1>, vector<4x8xf32>
    %cst_13 = arith.constant dense<0.000000e+00> : vector<8xf32>
    %34 = vector.multi_reduction <add>, %33, %cst_13 [0] : vector<4x8xf32> to vector<8xf32>
    %35 = vector.shape_cast %34 : vector<8xf32> to vector<1x8xf32>
    %36 = tpu.iota {dimensions = array<i32: 1>} : vector<1x8xi32>
    %c8_i32 = arith.constant 8 : i32
    %37 = arith.muli %arg0, %c8_i32 : i32
    %38 = vector.broadcast %37 : i32 to vector<1x8xi32>
    %39 = arith.addi %38, %36 : vector<1x8xi32>
    %c8_i32_14 = arith.constant 8 : i32
    %40 = vector.broadcast %c8_i32_14 : i32 to vector<1x8xi32>
    %41 = arith.cmpi slt, %39, %40 : vector<1x8xi32>
    %cst_15 = arith.constant 0.000000e+00 : f32
    %42 = vector.broadcast %cst_15 : f32 to vector<1x8xf32>
    %43 = arith.select %41, %35, %42 : vector<1x8xi1>, vector<1x8xf32>
    %c0_i32 = arith.constant 0 : i32
    %44 = arith.cmpi eq, %arg0, %c0_i32 : i32
    %45 = arith.extui %44 : i1 to i32
    %c0_i32_16 = arith.constant 0 : i32
    %46 = arith.cmpi ne, %45, %c0_i32_16 : i32
    scf.if %46 {
      %cst_29 = arith.constant 0.000000e+00 : f32
      %61 = vector.broadcast %cst_29 : f32 to vector<1x1xf32>
      %c0_30 = arith.constant 0 : index
      %c0_31 = arith.constant 0 : index
      %62 = vector.load %arg6[%c0_30, %c0_31] : memref<1x1xf32, #tpu.memory_space<vmem>>, vector<1x1xf32>
      tpu.vector_store %arg6[%c0_30, %c0_31], %61 {strides = array<i32>} : memref<1x1xf32, #tpu.memory_space<vmem>>, vector<1x1xf32>,
      %cst_32 = arith.constant 0.000000e+00 : f32
      %63 = vector.broadcast %cst_32 : f32 to vector<1x1xf32>
      %c0_33 = arith.constant 0 : index
      %c0_34 = arith.constant 0 : index
      %64 = vector.load %arg7[%c0_33, %c0_34] : memref<1x1xf32, #tpu.memory_space<vmem>>, vector<1x1xf32>
      tpu.vector_store %arg7[%c0_33, %c0_34], %63 {strides = array<i32>} : memref<1x1xf32, #tpu.memory_space<vmem>>, vector<1x1xf32>,
    } else {
    }
    %c0_17 = arith.constant 0 : index
    %c0_18 = arith.constant 0 : index
    %47 = vector.load %arg6[%c0_17, %c0_18] : memref<1x1xf32, #tpu.memory_space<vmem>>, vector<1x1xf32>
    %48 = arith.mulf %43, %29 : vector<1x8xf32>
    %cst_19 = arith.constant dense<0.000000e+00> : vector<1xf32>
    %49 = vector.multi_reduction <add>, %48, %cst_19 [1] : vector<1x8xf32> to vector<1xf32>
    %50 = vector.shape_cast %49 : vector<1xf32> to vector<1x1xf32>
    %51 = arith.addf %47, %50 : vector<1x1xf32>
    %c0_20 = arith.constant 0 : index
    %c0_21 = arith.constant 0 : index
    %52 = vector.load %arg6[%c0_20, %c0_21] : memref<1x1xf32, #tpu.memory_space<vmem>>, vector<1x1xf32>
    tpu.vector_store %arg6[%c0_20, %c0_21], %51 {strides = array<i32>} : memref<1x1xf32, #tpu.memory_space<vmem>>, vector<1x1xf32>,
    %c0_22 = arith.constant 0 : index
    %c0_23 = arith.constant 0 : index
    %53 = vector.load %arg7[%c0_22, %c0_23] : memref<1x1xf32, #tpu.memory_space<vmem>>, vector<1x1xf32>
    %cst_24 = arith.constant dense<0.000000e+00> : vector<1xf32>
    %54 = vector.multi_reduction <add>, %43, %cst_24 [1] : vector<1x8xf32> to vector<1xf32>
    %55 = vector.shape_cast %54 : vector<1xf32> to vector<1x1xf32>
    %56 = arith.addf %53, %55 : vector<1x1xf32>
    %c0_25 = arith.constant 0 : index
    %c0_26 = arith.constant 0 : index
    %57 = vector.load %arg7[%c0_25, %c0_26] : memref<1x1xf32, #tpu.memory_space<vmem>>, vector<1x1xf32>
    tpu.vector_store %arg7[%c0_25, %c0_26], %56 {strides = array<i32>} : memref<1x1xf32, #tpu.memory_space<vmem>>, vector<1x1xf32>,
    %c0_i32_27 = arith.constant 0 : i32
    %58 = arith.cmpi eq, %arg0, %c0_i32_27 : i32
    %59 = arith.extui %58 : i1 to i32
    %c0_i32_28 = arith.constant 0 : i32
    %60 = arith.cmpi ne, %59, %c0_i32_28 : i32
    scf.if %60 {
      %c0_29 = arith.constant 0 : index
      %c0_30 = arith.constant 0 : index
      %61 = vector.load %arg6[%c0_29, %c0_30] : memref<1x1xf32, #tpu.memory_space<vmem>>, vector<1x1xf32>
      %c0_31 = arith.constant 0 : index
      %c0_32 = arith.constant 0 : index
      %62 = vector.load %arg7[%c0_31, %c0_32] : memref<1x1xf32, #tpu.memory_space<vmem>>, vector<1x1xf32>
      %63 = arith.divf %61, %62 : vector<1x1xf32>
      %c0_33 = arith.constant 0 : index
      %c0_34 = arith.constant 0 : index
      %64 = vector.load %arg5[%c0_33, %c0_34] : memref<1x1xf32, #tpu.memory_space<vmem>>, vector<1x1xf32>
      tpu.vector_store %arg5[%c0_33, %c0_34], %63 {strides = array<i32>} : memref<1x1xf32, #tpu.memory_space<vmem>>, vector<1x1xf32>,
    } else {
    }
    return
  }
  func.func @transform_0(%arg0: i32) -> (i32, i32) {
    %c0_i32 = arith.constant 0 : i32
    %c0_i32_0 = arith.constant 0 : i32
    return %c0_i32, %arg0 : i32, i32
  }
  func.func @transform_1(%arg0: i32) -> (i32, i32) {
    %c0_i32 = arith.constant 0 : i32
    %c0_i32_0 = arith.constant 0 : i32
    return %c0_i32, %arg0 : i32, i32
  }
  func.func @transform_2(%arg0: i32) -> (i32, i32) {
    %c0_i32 = arith.constant 0 : i32
    %c0_i32_0 = arith.constant 0 : i32
    %c0_i32_1 = arith.constant 0 : i32
    return %c0_i32, %c0_i32_0 : i32, i32
  }
  func.func @transform_3(%arg0: i32) -> (i32, i32) {
    %c0_i32 = arith.constant 0 : i32
    %c0_i32_0 = arith.constant 0 : i32
    return %c0_i32, %arg0 : i32, i32
  }
  func.func @transform_4(%arg0: i32) -> (i32, i32) {
    %c0_i32 = arith.constant 0 : i32
    %c0_i32_0 = arith.constant 0 : i32
    %c0_i32_1 = arith.constant 0 : i32
    return %c0_i32, %c0_i32_0 : i32, i32
  }
}

</mosaic_0001>

<llo_original>
// kernel: tpu_custom_call.1
$region0: #{tpu_custom_call.1}
  #allocation0 [shape = 'u32[]', space=smem, size = 0x4, offset = 0x4, fixed_abs, tag = 'smem constant byte address 0x4 - core index']
  #allocation1 [shape = 'u32[72,128]{1,0:T(1,128)}', space=vmem, size = 0x9000, scoped, tag = 'internal scratch']
  #allocation2 [shape = 'f32[1,1]{1,0:T(1,128)}', space=vmem, size = 0x200, scoped, tag = 'scratch operand']
  #allocation3 [shape = 'f32[1,1]{1,0:T(1,128)}', space=vmem, size = 0x200, scoped, tag = 'scratch operand']
  %s0 = inlined_call_operand.vmem [shape: f32[4,8], index: 0, kind: input, shape index: {}]
  %s1 = inlined_call_operand.hbm [shape: f32[4,8], index: 1, kind: input, shape index: {}]
  %s2 = inlined_call_operand.vmem [shape: f32[4,1], index: 2, kind: input, shape index: {}]
  %s3 = inlined_call_operand.hbm [shape: f32[1,8], index: 3, kind: output, shape index: {0}]
  %s4 = inlined_call_operand.hbm [shape: f32[1,1], index: 4, kind: output, shape index: {1}]
  %5 = xla_tuple %s3, %s4
  %s6 = sld [smem:[#allocation0]]
  $region42: #{tpu_custom_call.1} parent=0
    _
  %s8 = ssub.s32 1, %s6
  %s9 = scalar_select 0, %s8, %s6
  $region1: #{tpu_custom_call.1} parent=0
    #allocation4 [shape = 'u8[2048]{0}', space=vmem, size = 0x800, scoped, tag = 'input window, operand 1, single buffered']
    #allocation5 [shape = 's32[1]{0}', space=sflag, size = 0x4, scoped, tag = 'scoped memory for tpu_custom_call.1']
    #allocation6 [shape = 's32[1]{0}', space=sflag, size = 0x4, scoped, tag = 'scoped memory for tpu_custom_call.1']
    #allocation7 [shape = 'u8[512]{0}', space=vmem, size = 0x400, scoped, tag = 'output window, operand 0, single buffered']
    #allocation8 [shape = 'u8[512]{0}', space=vmem, size = 0x400, scoped, tag = 'output window, operand 1, single buffered']
    #allocation9 [shape = 's32[1]{0}', space=sflag, size = 0x4, scoped, tag = 'scoped memory for tpu_custom_call.1']
    %10 = vsyncpa [#allocation5], 0
    %11 = vsyncpa [#allocation6], 0
    %12 = vsyncpa [#allocation9], 0
    // Predicated region
    $region2: #{tpu_custom_call.1} parent=1 // pred_check
      _
    $region3: #{tpu_custom_call.1} parent=1 // pred_check_branch
      %14 = sbr.rel (0) target = $region5
    $region4: #{tpu_custom_call.1} parent=1 // pred_region
      _
    $region5: #{tpu_custom_call.1} parent=1 // pred_fallthru
      _
    // Predicated region
    $region6: #{tpu_custom_call.1} parent=1 // pred_check
      _
    $region7: #{tpu_custom_call.1} parent=1 // pred_check_branch
      %16 = sbr.rel (0) target = $region9
    $region8: #{tpu_custom_call.1} parent=1 // pred_region
      %18 = vsyncadd [#allocation5], 0
      %s20 = sshll.u32 %s1, 4
      %s21 = int_to_ptr.hbm [resolvable:$true] %s20
      %s22 = sshll.u32 [#allocation4], 4
      %s23 = int_to_ptr.vmem [resolvable:$true] %s22
      %25 = dma.hbm_to_vmem [thread:$0]  %s21, 64, %s23, [#allocation5]
    $region9: #{tpu_custom_call.1} parent=1 // pred_fallthru
      _
    // Predicated region
    $region10: #{tpu_custom_call.1} parent=1 // pred_check
      _
    $region11: #{tpu_custom_call.1} parent=1 // pred_check_branch
      %27 = sbr.rel (0) target = $region13
    $region12: #{tpu_custom_call.1} parent=1 // pred_region
      _
    $region13: #{tpu_custom_call.1} parent=1 // pred_fallthru
      _
    // Predicated region
    $region14: #{tpu_custom_call.1} parent=1 // pred_check
      _
    $region15: #{tpu_custom_call.1} parent=1 // pred_check_branch
      %29 = sbr.rel (0) target = $region17
    $region16: #{tpu_custom_call.1} parent=1 // pred_region
      %31 = dma.done [#allocation5], 64
    $region17: #{tpu_custom_call.1} parent=1 // pred_fallthru
      _
    %v32 = vld [vmem:[%s0] sm:$0xf]
    %v33 = vld [vmem:[#allocation4] sm:$0xf]
    %v34 = vld [vmem:[%s2] sm:$0xf]
    %vm35 = vcmask 60416
    %v36 = vsel %vm35, %v32, -inf
    %v37 = vrot.slane %v36, 4
    %v38 = vmax.f32 %v36, %v37
    %v39 = vrot.slane %v38, 2
    %v40 = vmax.f32 %v38, %v39
    %v41 = vrot.slane %v40, 1
    %v42 = vmax.f32 %v40, %v41
    %v43 = vsub.f32 %v32, %v42
    %v44 = vmul.f32 %v43, 1.442695
    %v45 = vpow.pop %v44
    %v46 = vsel %vm35, %v45, 0.0
    %v47 = vrot.slane %v46, 4
    %v48 = vadd.f32 %v46, %v47
    %v49 = vrot.slane %v48, 2
    %v50 = vadd.f32 %v48, %v49
    %v51 = vrot.slane %v50, 1
    %v52 = vadd.f32 %v50, %v51
    %v53 = vrcp.pop %v52
    %v54 = vmul.f32 %v52, %v53
    %v55 = vsub.f32 1.0, %v54
    %v56 = vmul.f32 %v53, %v55
    %v57 = vadd.f32 %v53, %v56
    %vm58 = vweird.f32 %v52
    %vm59 = vweird.f32 %v53
    %vm60 = vmor %vm58, %vm59
    %v61 = vsel %vm60, %v53, %v57
    %v62 = vand.u32 2147483647, %v52
    %vm63 = vcmp.eq.f32.partialorder %v62, 8.507059e+37
    %v64 = vand.u32 %v52, 2147483648
    %v65 = vor.u32 1.1754944e-38, %v64
    %v66 = vsel %vm63, %v65, %v61
    %vm67 = vcmask 57344
    %68 = vst.msk [vmem:[#allocation7] sm:$0x1] %vm67, %v66
    %v69 = vlaneseq
    %v70 = vshrl.u32 %v69, 7
    %v71 = vsel %vm35, %v33, -inf
    %v72 = vrot.slane %v71, 4
    %v73 = vmax.f32 %v71, %v72
    %v74 = vrot.slane %v73, 2
    %v75 = vmax.f32 %v73, %v74
    %v76 = vrot.slane %v75, 1
    %v77 = vmax.f32 %v75, %v76
    %vm78 = vcmp.eq.f32.partialorder %v33, %v77
    %v79 = vsel %vm78, %v70, 4
    %v80 = vsel %vm35, %v79, 2147483647
    %v81 = vrot.slane %v80, 4
    %vm82 = vcmp.lt.s32.totalorder %v80, %v81
    %v83 = vsel %vm82, %v80, %v81
    %v84 = vrot.slane %v83, 2
    %vm85 = vcmp.lt.s32.totalorder %v83, %v84
    %v86 = vsel %vm85, %v83, %v84
    %v87 = vrot.slane %v86, 1
    %vm88 = vcmp.lt.s32.totalorder %v86, %v87
    %v89 = vsel %vm88, %v86, %v87
    %vm90 = vcmp.eq.s32.totalorder %v70, %v89
    %v91 = vlog2.pop %v52
    %v92 = vmul.f32 %v91, 0.6931472
    %v93 = vadd.f32 %v42, %v92
    %v94 = vsel %vm90, %v32, 0.0
    %v95 = vsel %vm35, %v94, 0.0
    %v96 = vrot.slane %v95, 4
    %v97 = vadd.f32 %v95, %v96
    %v98 = vrot.slane %v97, 2
    %v99 = vadd.f32 %v97, %v98
    %v100 = vrot.slane %v99, 1
    %v101 = vadd.f32 %v99, %v100
    %v102 = vsub.f32 %v93, %v101
    %104 = vset.pattern.permute.xlu0 0
    %105 = vperm.xlu0 %104, %v34
    %v106 = vpop.permute.xlu0 %105
    %v108 = vsel %vm90, %v106, 0.0
    %v109 = vsel %vm35, %v108, 0.0
    %v110 = vrot.slane %v109, 4
    %v111 = vadd.f32 %v109, %v110
    %v112 = vrot.slane %v111, 2
    %v113 = vadd.f32 %v111, %v112
    %v114 = vrot.slane %v113, 1
    %v115 = vadd.f32 %v113, %v114
    %v116 = vlaneseq
    %v117 = vand.u32 %v116, 127
    %s118 = smul.u32 0, 8
    %v119 = vstv %s118
    %v120 = vadd.s32 %v119, %v117
    %vm121 = vcmp.lt.s32.totalorder %v120, 8
    %v122 = vsel %vm121, %v115, 0.0
    %p123 = scmp.eq.s32.totalorder 0, 0
    // Predicated region
    $region18: #{tpu_custom_call.1} parent=1 // pred_check
      %p124 = pneg %p123
    $region19: #{tpu_custom_call.1} parent=1 // pred_check_branch
      %126 = sbr.rel (%p124) target = $region21
    $region20: #{tpu_custom_call.1} parent=1 // pred_region
      %vm127 = vcmask 0
      %128 = vst.msk [vmem:[#allocation2] sm:$0x1] %vm127, 0.0
      %129 = vst.msk [vmem:[#allocation3] sm:$0x1] %vm127, 0.0
    $region21: #{tpu_custom_call.1} parent=1 // pred_fallthru
      _
    %v130 = vld [vmem:[#allocation2] sm:$0x1]
    %v131 = vmul.f32 %v122, %v102
    %vm132 = vcmask 64512
    %v133 = vsel %vm132, %v131, 0.0
    %134 = vadd.xlane.f32.xlu0 %v133
    %v135 = vpop.xlane.xlu0 %134
    %v136 = vadd.f32 %v130, %v135
    %vm137 = vcmask 0
    %138 = vst.msk [vmem:[#allocation2] sm:$0x1] %vm137, %v136
    %v139 = vld [vmem:[#allocation3] sm:$0x1]
    %v140 = vsel %vm132, %v122, 0.0
    %141 = vadd.xlane.f32.xlu0 %v140
    %v142 = vpop.xlane.xlu0 %141
    %v143 = vadd.f32 %v139, %v142
    %144 = vst.msk [vmem:[#allocation3] sm:$0x1] %vm137, %v143
    // Predicated region
    $region22: #{tpu_custom_call.1} parent=1 // pred_check
      %p145 = pneg %p123
    $region23: #{tpu_custom_call.1} parent=1 // pred_check_branch
      %147 = sbr.rel (%p145) target = $region25
    $region24: #{tpu_custom_call.1} parent=1 // pred_region
      %v148 = vld [vmem:[#allocation2] sm:$0x1]
      %v149 = vld [vmem:[#allocation3] sm:$0x1]
      %v150 = vrcp.pop %v149
      %v151 = vmul.f32 %v149, %v150
      %v152 = vsub.f32 1.0, %v151
      %v153 = vmul.f32 %v150, %v152
      %v154 = vadd.f32 %v150, %v153
      %vm155 = vweird.f32 %v149
      %vm156 = vweird.f32 %v150
      %vm157 = vmor %vm155, %vm156
      %v158 = vsel %vm157, %v150, %v154
      %v159 = vand.u32 2147483647, %v149
      %vm160 = vcmp.eq.f32.partialorder %v159, 8.507059e+37
      %v161 = vand.u32 %v149, 2147483648
      %v162 = vor.u32 1.1754944e-38, %v161
      %v163 = vsel %vm160, %v162, %v158
      %v164 = vmul.f32 %v148, %v163
      %165 = vst.msk [vmem:[#allocation8] sm:$0x1] %vm137, %v164
    $region25: #{tpu_custom_call.1} parent=1 // pred_fallthru
      _
    // Predicated region
    $region26: #{tpu_custom_call.1} parent=1 // pred_check
      _
    $region27: #{tpu_custom_call.1} parent=1 // pred_check_branch
      %167 = sbr.rel (0) target = $region29
    $region28: #{tpu_custom_call.1} parent=1 // pred_region
      %169 = vsyncadd [#allocation6], 0
      %s171 = sshll.u32 [#allocation7], 4
      %s172 = int_to_ptr.vmem [resolvable:$true] %s171
      %s173 = sshll.u32 %s3, 4
      %s174 = int_to_ptr.hbm [resolvable:$true] %s173
      %176 = dma.vmem_to_hbm [thread:$0]  %s172, 16, %s174, [#allocation6]
    $region29: #{tpu_custom_call.1} parent=1 // pred_fallthru
      _
    // Predicated region
    $region30: #{tpu_custom_call.1} parent=1 // pred_check
      _
    $region31: #{tpu_custom_call.1} parent=1 // pred_check_branch
      %178 = sbr.rel (0) target = $region33
    $region32: #{tpu_custom_call.1} parent=1 // pred_region
      %180 = vsyncadd [#allocation9], 0
      %s182 = sshll.u32 [#allocation8], 4
      %s183 = int_to_ptr.vmem [resolvable:$true] %s182
      %s184 = sshll.u32 %s4, 4
      %s185 = int_to_ptr.hbm [resolvable:$true] %s184
      %187 = dma.vmem_to_hbm [thread:$0]  %s183, 16, %s185, [#allocation9]
    $region33: #{tpu_custom_call.1} parent=1 // pred_fallthru
      _
    // Predicated region
    $region34: #{tpu_custom_call.1} parent=1 // pred_check
      _
    $region35: #{tpu_custom_call.1} parent=1 // pred_check_branch
      %189 = sbr.rel (0) target = $region37
    $region36: #{tpu_custom_call.1} parent=1 // pred_region
      %191 = dma.done [#allocation6], 16
    $region37: #{tpu_custom_call.1} parent=1 // pred_fallthru
      _
    // Predicated region
    $region38: #{tpu_custom_call.1} parent=1 // pred_check
      _
    $region39: #{tpu_custom_call.1} parent=1 // pred_check_branch
      %193 = sbr.rel (0) target = $region41
    $region40: #{tpu_custom_call.1} parent=1 // pred_region
      %195 = dma.done [#allocation9], 16
    $region41: #{tpu_custom_call.1} parent=1 // pred_fallthru
      _
    %196 = vsyncpa [#allocation5], 1
    %197 = vsyncpa [#allocation6], 1
    %198 = vsyncpa [#allocation9], 1

</llo_original>
